<compile_context>
chip_gen: v7x
topology: tpu7x:2x2x1
jax: 0.10.0
libtpu: 0.0.40
codegen_flags: <defaults>
</compile_context>

<pallas_src>
import jax
import jax.numpy as jnp
from jax import lax
from jax.experimental import pallas as pl
from jax.experimental.pallas import tpu as pltpu


def _round_up(x, m):
    return ((x + m - 1) // m) * m


def _make_kernel(filter_sizes, filter_num, seq_len, n_win, k_pad, mxu_dtype):
    fs_max = max(filter_sizes)
    fs_min = min(filter_sizes)
    nfs = len(filter_sizes)
    ncols = nfs * filter_num + 1               # +1: constant-1 column carrying bff
    needs_mask = any(fs != fs_min for fs in filter_sizes)

    def kernel(x_ref, wconv_ref, wff_ref, out_ref):
        x = x_ref[...]                         # (TB, L_p, D) f32, time zero-padded
        TB, _, D = x.shape

        # --- shared im2col window build (done once for all filter sizes) ---
        parts = [x[:, k:k + n_win, :] for k in range(fs_max)]
        pad_w = k_pad - fs_max * D
        # pad block: lane 0 is the constant-1 "bias lane", remaining lanes zero.
        lane = lax.broadcasted_iota(jnp.int32, (TB, n_win, pad_w), 2)
        parts.append((lane == 0).astype(jnp.float32))
        xw = jnp.concatenate(parts, axis=-1)   # (TB, n_win, k_pad), k_pad % 128 == 0

        # --- one MXU matmul for every filter size (+ bias via the ones lane) ---
        conv = lax.dot_general(
            xw.astype(mxu_dtype), wconv_ref[...].astype(mxu_dtype),
            dimension_numbers=(((2,), (0,)), ((), ())),
            preferred_element_type=jnp.float32)        # (TB, n_win, ncols)
        conv = jnp.maximum(conv, 0.0)                  # ReLU on the VPU, f32

        # --- mask trailing windows that spill into the time padding (only for
        #     filter sizes larger than fs_min) before the time-sum ---
        if needs_mask:
            t_iota = lax.broadcasted_iota(jnp.int32, conv.shape, 1)
            c_iota = lax.broadcasted_iota(jnp.int32, conv.shape, 2)
            thresh = jnp.full(conv.shape, n_win, jnp.int32)
            for i, fs in enumerate(filter_sizes):
                l_out = seq_len - fs + 1
                if l_out == n_win:
                    continue
                blk = (c_iota >= i * filter_num) & (c_iota < (i + 1) * filter_num)
                thresh = jnp.where(blk, l_out, thresh)
            conv = jnp.where(t_iota < thresh, conv, 0.0)

        # avg-pool over time: 1/l_out is folded into the ff weight, so sum here.
        pooled = jnp.sum(conv, axis=1)                 # (TB, ncols)

        # --- single ff matmul; bff folded via the constant-1 pooled column ---
        out = jnp.dot(pooled.astype(mxu_dtype), wff_ref[...].astype(mxu_dtype),
                      preferred_element_type=jnp.float32)   # (TB, hdim_pad)
        out_ref[...] = out

    return kernel


def desc_encoder_forward(x, conv_ws, conv_bs, wff, bff, *, filter_sizes,
                         filter_num, hdim, batch_block=256,
                         mxu_dtype=jnp.float32):
    """x: (B, L, D) f32.  conv_ws[i]: (fs_i, D, F).  conv_bs[i]: (1, F).
    wff: (nfs*F, hdim).  bff: (1, hdim).  Returns (B, hdim) f32."""
    B, L, D = x.shape
    filter_sizes = tuple(filter_sizes)
    nfs = len(filter_sizes)
    fs_max, fs_min = max(filter_sizes), min(filter_sizes)
    F = filter_num

    n_win = L - fs_min + 1                     # windows needed by the smallest fs
    L_p = n_win - 1 + fs_max                   # time length after zero padding
    ncols = nfs * F + 1                        # conv output columns (+1 bias col)
    k_pad = _round_up(fs_max * D + 1, 128)     # dense 128-lane MXU K
    hdim_pad = _round_up(hdim, 128)            # lane-dense output stores

    # ---- pack conv weights + biases into one (k_pad, ncols) slab ----
    wconv = jnp.zeros((k_pad, ncols), jnp.float32)
    for i, (fs, w, b) in enumerate(zip(filter_sizes, conv_ws, conv_bs)):
        wconv = wconv.at[:fs * D, i * F:(i + 1) * F].set(
            w.reshape(fs * D, F).astype(jnp.float32))
        wconv = wconv.at[fs_max * D, i * F:(i + 1) * F].set(
            b.reshape(F).astype(jnp.float32))          # bias row hits the ones lane
    wconv = wconv.at[fs_max * D, nfs * F].set(1.0)     # constant-1 output column

    # ---- pack ff weight + bias into one (ncols, hdim_pad) slab ----
    # avg-pool 1/l_out folded per row block; bff folded via the constant column.
    wffp = jnp.zeros((ncols, hdim_pad), jnp.float32)
    for i, fs in enumerate(filter_sizes):
        l_out = L - fs + 1
        wffp = wffp.at[i * F:(i + 1) * F, :hdim].set(
            wff[i * F:(i + 1) * F, :].astype(jnp.float32) * (1.0 / l_out))
    wffp = wffp.at[nfs * F, :hdim].set(bff.reshape(hdim).astype(jnp.float32) / n_win)

    # ---- batch tiling: big tiles; even, 8-aligned step count when tiled ----
    if B <= batch_block:
        tb = B
        b_pad = B
    else:
        steps = pl.cdiv(B, batch_block)
        steps = steps + (steps % 2)            # even #steps so v7x's 2 TCs balance
        tb = _round_up(pl.cdiv(B, steps), 8)   # 8-aligned output sublane tile
        b_pad = steps * tb

    x_p = x.astype(jnp.float32)
    if b_pad != B or L_p != L:
        x_p = jnp.pad(x_p, ((0, b_pad - B), (0, L_p - L), (0, 0)))

    kernel = _make_kernel(filter_sizes, F, L, n_win, k_pad, mxu_dtype)

    flops = 2 * b_pad * n_win * k_pad * ncols + 2 * b_pad * ncols * hdim_pad
    bytes_accessed = 4 * (b_pad * L_p * D + k_pad * ncols
                          + ncols * hdim_pad + b_pad * hdim_pad)

    out = pl.pallas_call(
        kernel,
        out_shape=jax.ShapeDtypeStruct((b_pad, hdim_pad), jnp.float32),
        grid=(b_pad // tb,),
        in_specs=[
            pl.BlockSpec((tb, L_p, D), lambda i: (i, 0, 0)),
            pl.BlockSpec((k_pad, ncols), lambda i: (0, 0)),
            pl.BlockSpec((ncols, hdim_pad), lambda i: (0, 0)),
        ],
        out_specs=pl.BlockSpec((tb, hdim_pad), lambda i: (i, 0)),
        compiler_params=pltpu.CompilerParams(
            dimension_semantics=("parallel",)),
        cost_estimate=pl.CostEstimate(flops=flops, transcendentals=0,
                                      bytes_accessed=bytes_accessed),
    )(x_p, wconv, wffp)

    return out[:B, :hdim]


def reference_forward(x, conv_ws, conv_bs, wff, bff):
    pooled = []
    for w, b in zip(conv_ws, conv_bs):
        fs = w.shape[0]
        l_out = x.shape[1] - fs + 1
        conv = sum(jnp.einsum('bld,df->blf', x[:, k:k + l_out, :], w[k])
                   for k in range(fs)) + b[None]
        conv = jax.nn.relu(conv)
        pooled.append(conv.mean(axis=1))
    rep = jnp.concatenate(pooled, axis=-1)
    return rep @ wff + bff


if __name__ == "__main__":
    # args = {'wdim': 32, 'filter_num': 8, 'filter_sizes': [2, 3],
    #         'ncands': 5, 'hdim': 32}
    wdim = 32
    filter_num = 8
    filter_sizes = (2, 3)
    ncands = 5
    hdim = 32
    batch, seq = 2, 12

    key = jax.random.PRNGKey(0)
    k_x, k_ff, k_ffb, k_cand, *k_conv = jax.random.split(key, 4 + 2 * len(filter_sizes))

    # Input descriptions: (B, L, D)  (PyTorch would see NCHW (B, 1, L, D)).
    x = jax.random.normal(k_x, (batch, seq, wdim), dtype=jnp.float32)

    # Conv weights, stored as (fs, D, F).
    conv_ws, conv_bs = [], []
    for i, fs in enumerate(filter_sizes):
        fan_in = fs * wdim
        conv_ws.append(jax.random.normal(k_conv[2 * i], (fs, wdim, filter_num),
                                         dtype=jnp.float32) * (1.0 / fan_in) ** 0.5)
        conv_bs.append((jax.random.uniform(k_conv[2 * i + 1], (1, filter_num),
                                           dtype=jnp.float32) - 0.5) * 0.1)

    # fflayer_desc: Linear(filter_num*nfs -> hdim), xavier_normal weight.
    in_feat = filter_num * len(filter_sizes)
    std_ff = (2.0 / (in_feat + hdim)) ** 0.5
    wff = jax.random.normal(k_ff, (in_feat, hdim), dtype=jnp.float32) * std_ff
    bff = (jax.random.uniform(k_ffb, (1, hdim), dtype=jnp.float32) - 0.5) * 0.1

    # linear_weights_desc: initialized in __init__ but unused in forward.
    std_cand = (2.0 / (in_feat + ncands)) ** 0.5
    w_cand = jax.random.normal(k_cand, (in_feat, ncands), dtype=jnp.float32) * std_cand
    del w_cand  # not used by forward()

    # --- small-batch run (grid of 1 step) ---
    out = desc_encoder_forward(x, conv_ws, conv_bs, wff, bff,
                               filter_sizes=filter_sizes,
                               filter_num=filter_num, hdim=hdim,
                               mxu_dtype=jnp.float32)
    out = jax.block_until_ready(out)
    ref = reference_forward(x, conv_ws, conv_bs, wff, bff)
    assert out.shape == (batch, hdim)
    assert jnp.allclose(out, ref, atol=1e-4, rtol=1e-4), (
        f"max abs err {jnp.max(jnp.abs(out - ref))}")

    # --- larger batch exercising the tiled (multi-step, padded) grid path ---
    xb = jax.random.normal(jax.random.PRNGKey(1), (40, seq, wdim), jnp.float32)
    out_b = desc_encoder_forward(xb, conv_ws, conv_bs, wff, bff,
                                 filter_sizes=filter_sizes,
                                 filter_num=filter_num, hdim=hdim,
                                 batch_block=16, mxu_dtype=jnp.float32)
    out_b = jax.block_until_ready(out_b)
    ref_b = reference_forward(xb, conv_ws, conv_bs, wff, bff)
    assert out_b.shape == (40, hdim)
    assert jnp.allclose(out_b, ref_b, atol=1e-4, rtol=1e-4), (
        f"max abs err {jnp.max(jnp.abs(out_b - ref_b))}")

    print("KERNEL_OK")
</pallas_src>

<mosaic_0001>
module attributes {stable_mosaic.version = 11 : i64} {
  func.func @kernel(%arg0: i32, %arg1: memref<2x13x32xf32, #tpu.memory_space<vmem>>, %arg2: memref<128x17xf32, #tpu.memory_space<vmem>>, %arg3: memref<17x128xf32, #tpu.memory_space<vmem>>, %arg4: memref<2x128xf32, #tpu.memory_space<vmem>>) attributes {dimension_semantics = [#tpu.dimension_semantics<parallel>], iteration_bounds = array<i64: 1>, scalar_prefetch = 0 : i64, scratch_operands = 0 : i64, tpu.core_type = #tpu.core_type<tc>, window_params = [{transform_indices = @transform_0, window_bounds = array<i64: 2, 13, 32>}, {pipeline_mode = #tpu.pipeline_mode<synchronous>, transform_indices = @transform_1, window_bounds = array<i64: 128, 17>}, {pipeline_mode = #tpu.pipeline_mode<synchronous>, transform_indices = @transform_2, window_bounds = array<i64: 17, 128>}, {transform_indices = @transform_3, window_bounds = array<i64: 2, 128>}]} {
    %c0 = arith.constant 0 : index
    %c0_0 = arith.constant 0 : index
    %c0_1 = arith.constant 0 : index
    %0 = vector.load %arg1[%c0, %c0_0, %c0_1] : memref<2x13x32xf32, #tpu.memory_space<vmem>>, vector<2x13x32xf32>
    %1 = vector.extract_strided_slice %0 {offsets = [0, 0, 0], sizes = [2, 11, 32], strides = [1, 1, 1]} : vector<2x13x32xf32> to vector<2x11x32xf32>
    %2 = vector.extract_strided_slice %0 {offsets = [0, 1, 0], sizes = [2, 11, 32], strides = [1, 1, 1]} : vector<2x13x32xf32> to vector<2x11x32xf32>
    %3 = vector.extract_strided_slice %0 {offsets = [0, 2, 0], sizes = [2, 11, 32], strides = [1, 1, 1]} : vector<2x13x32xf32> to vector<2x11x32xf32>
    %4 = tpu.iota {dimensions = array<i32: 2>} : vector<2x11x32xi32>
    %c0_i32 = arith.constant 0 : i32
    %5 = vector.broadcast %c0_i32 : i32 to vector<2x11x32xi32>
    %6 = arith.cmpi eq, %4, %5 : vector<2x11x32xi32>
    %7 = arith.extui %6 : vector<2x11x32xi1> to vector<2x11x32xi32>
    %8 = arith.sitofp %7 : vector<2x11x32xi32> to vector<2x11x32xf32>
    %9 = tpu.concatenate %1, %2, %3, %8 in 2 : vector<2x11x32xf32>, vector<2x11x32xf32>, vector<2x11x32xf32>, vector<2x11x32xf32> -> vector<2x11x128xf32>
    %c0_2 = arith.constant 0 : index
    %c0_3 = arith.constant 0 : index
    %10 = vector.load %arg2[%c0_2, %c0_3] : memref<128x17xf32, #tpu.memory_space<vmem>>, vector<128x17xf32>
    %cst = arith.constant dense<0.000000e+00> : vector<2x11x17xf32>
    %11 = tpu.matmul %9, %10, %cst {dimension_numbers = #tpu.dot_dimension_numbers<[2], [0], [0, 1], [1], [0, 0, 0, 1, 1, 1], [], []>} : vector<2x11x128xf32>, vector<128x17xf32>, vector<2x11x17xf32> -> vector<2x11x17xf32>
    %cst_4 = arith.constant 0.000000e+00 : f32
    %12 = vector.broadcast %cst_4 : f32 to vector<2x11x17xf32>
    %13 = arith.maximumf %11, %12 : vector<2x11x17xf32>
    %14 = tpu.iota {dimensions = array<i32: 1>} : vector<2x11x17xi32>
    %15 = tpu.iota {dimensions = array<i32: 2>} : vector<2x11x17xi32>
    %c11_i32 = arith.constant 11 : i32
    %16 = vector.broadcast %c11_i32 : i32 to vector<2x11x17xi32>
    %c8_i32 = arith.constant 8 : i32
    %17 = vector.broadcast %c8_i32 : i32 to vector<2x11x17xi32>
    %18 = arith.cmpi sge, %15, %17 : vector<2x11x17xi32>
    %c16_i32 = arith.constant 16 : i32
    %19 = vector.broadcast %c16_i32 : i32 to vector<2x11x17xi32>
    %20 = arith.cmpi slt, %15, %19 : vector<2x11x17xi32>
    %21 = arith.andi %18, %20 : vector<2x11x17xi1>
    %c10_i32 = arith.constant 10 : i32
    %22 = vector.broadcast %c10_i32 : i32 to vector<2x11x17xi32>
    %23 = arith.select %21, %22, %16 : vector<2x11x17xi1>, vector<2x11x17xi32>
    %24 = arith.cmpi slt, %14, %23 : vector<2x11x17xi32>
    %cst_5 = arith.constant 0.000000e+00 : f32
    %25 = vector.broadcast %cst_5 : f32 to vector<2x11x17xf32>
    %26 = arith.select %24, %13, %25 : vector<2x11x17xi1>, vector<2x11x17xf32>
    %cst_6 = arith.constant dense<0.000000e+00> : vector<2x17xf32>
    %27 = vector.multi_reduction <add>, %26, %cst_6 [1] : vector<2x11x17xf32> to vector<2x17xf32>
    %c0_7 = arith.constant 0 : index
    %c0_8 = arith.constant 0 : index
    %28 = vector.load %arg3[%c0_7, %c0_8] : memref<17x128xf32, #tpu.memory_space<vmem>>, vector<17x128xf32>
    %cst_9 = arith.constant dense<0.000000e+00> : vector<2x128xf32>
    %29 = tpu.matmul %27, %28, %cst_9 {dimension_numbers = #tpu.dot_dimension_numbers<[1], [0], [0], [1], [0, 0, 1, 1], [], []>} : vector<2x17xf32>, vector<17x128xf32>, vector<2x128xf32> -> vector<2x128xf32>
    %c0_10 = arith.constant 0 : index
    %c0_11 = arith.constant 0 : index
    %30 = vector.load %arg4[%c0_10, %c0_11] : memref<2x128xf32, #tpu.memory_space<vmem>>, vector<2x128xf32>
    tpu.vector_store %arg4[%c0_10, %c0_11], %29 {strides = array<i32>} : memref<2x128xf32, #tpu.memory_space<vmem>>, vector<2x128xf32>,
    return
  }
  func.func @transform_0(%arg0: i32) -> (i32, i32, i32) {
    %c0_i32 = arith.constant 0 : i32
    %c0_i32_0 = arith.constant 0 : i32
    %c0_i32_1 = arith.constant 0 : i32
    return %arg0, %c0_i32, %c0_i32_0 : i32, i32, i32
  }
  func.func @transform_1(%arg0: i32) -> (i32, i32) {
    %c0_i32 = arith.constant 0 : i32
    %c0_i32_0 = arith.constant 0 : i32
    %c0_i32_1 = arith.constant 0 : i32
    return %c0_i32, %c0_i32_0 : i32, i32
  }
  func.func @transform_2(%arg0: i32) -> (i32, i32) {
    %c0_i32 = arith.constant 0 : i32
    %c0_i32_0 = arith.constant 0 : i32
    %c0_i32_1 = arith.constant 0 : i32
    return %c0_i32, %c0_i32_0 : i32, i32
  }
  func.func @transform_3(%arg0: i32) -> (i32, i32) {
    %c0_i32 = arith.constant 0 : i32
    %c0_i32_0 = arith.constant 0 : i32
    return %arg0, %c0_i32 : i32, i32
  }
}

</mosaic_0001>

<llo_original>
// kernel: tpu_custom_call.1
$region0: #{tpu_custom_call.1}
  #allocation0 [shape = 'u32[]', space=smem, size = 0x4, offset = 0x4, fixed_abs, tag = 'smem constant byte address 0x4 - core index']
  #allocation1 [shape = 'u32[144,128]{1,0:T(1,128)}', space=vmem, size = 0x12000, scoped, tag = 'internal scratch']
  %s0 = inlined_call_operand.vmem [shape: f32[2,13,32], index: 0, kind: input, shape index: {}]
  %s1 = inlined_call_operand.vmem [shape: f32[128,17], index: 1, kind: input, shape index: {}]
  %s2 = inlined_call_operand.vmem [shape: f32[17,128], index: 2, kind: input, shape index: {}]
  %s3 = inlined_call_operand.hbm [shape: f32[2,128], index: 3, kind: output, shape index: {}]
  %s4 = sld [smem:[#allocation0]]
  $region22: #{tpu_custom_call.1} parent=0
    _
  %s6 = ssub.s32 1, %s4
  %s7 = scalar_select 0, %s6, %s4
  $region1: #{tpu_custom_call.1} parent=0
    #allocation2 [shape = 'u8[1024]{0}', space=vmem, size = 0x400, scoped, tag = 'output window, operand 0, single buffered']
    #allocation3 [shape = 's32[1]{0}', space=sflag, size = 0x4, scoped, tag = 'scoped memory for tpu_custom_call.1']
    %8 = vsyncpa [#allocation3], 0
    // Predicated region
    $region2: #{tpu_custom_call.1} parent=1 // pred_check
      _
    $region3: #{tpu_custom_call.1} parent=1 // pred_check_branch
      %10 = sbr.rel (0) target = $region5
    $region4: #{tpu_custom_call.1} parent=1 // pred_region
      _
    $region5: #{tpu_custom_call.1} parent=1 // pred_fallthru
      _
    // Predicated region
    $region6: #{tpu_custom_call.1} parent=1 // pred_check
      _
    $region7: #{tpu_custom_call.1} parent=1 // pred_check_branch
      %12 = sbr.rel (0) target = $region9
    $region8: #{tpu_custom_call.1} parent=1 // pred_region
      _
    $region9: #{tpu_custom_call.1} parent=1 // pred_fallthru
      _
    // Predicated region
    $region10: #{tpu_custom_call.1} parent=1 // pred_check
      _
    $region11: #{tpu_custom_call.1} parent=1 // pred_check_branch
      %14 = sbr.rel (0) target = $region13
    $region12: #{tpu_custom_call.1} parent=1 // pred_region
      _
    $region13: #{tpu_custom_call.1} parent=1 // pred_fallthru
      _
    %v15 = vld [vmem:[%s0] sm:$0xff]
    %v16 = vld [vmem:[%s0 + $0x8] sm:$0x1f]
    %v17 = vld [vmem:[%s0 + $0x10] sm:$0xff]
    %v18 = vld [vmem:[%s0 + $0x18] sm:$0x1f]
    %v19 = vlaneseq
    %v20 = vand.u32 %v19, 127
    %vm21 = vcmp.eq.s32.totalorder %v20, 0
    %v22 = vsel %vm21, 1, 0
    %v23 = vcvt.s32.f32 %v22
    %vm28 = vcmask 1046528
    %v29 = vrot.slane %v15, 1
    %v30 = vrot.slane %v16, 1
    %v31 = vsel %vm28, %v29, %v30
    %v32 = vrot.slane %v17, 1
    %v33 = vrot.slane %v18, 1
    %v34 = vsel %vm28, %v32, %v33
    %35 = vrot.lane.b32.xlu0 %v31, 32
    %v36 = vpop.permute.xlu0 %35
    %37 = vrot.lane.b32.xlu0 %v30, 32
    %v38 = vpop.permute.xlu0 %37
    %39 = vrot.lane.b32.xlu0 %v34, 32
    %v40 = vpop.permute.xlu0 %39
    %41 = vrot.lane.b32.xlu0 %v33, 32
    %v42 = vpop.permute.xlu0 %41
    %vm47 = vcmask 1045504
    %v48 = vrot.slane %v15, 2
    %v49 = vrot.slane %v16, 2
    %v50 = vsel %vm47, %v48, %v49
    %v51 = vrot.slane %v17, 2
    %v52 = vrot.slane %v18, 2
    %v53 = vsel %vm47, %v51, %v52
    %54 = vrot.lane.b32.xlu0 %v50, 64
    %v55 = vpop.permute.xlu0 %54
    %56 = vrot.lane.b32.xlu0 %v49, 64
    %v57 = vpop.permute.xlu0 %56
    %58 = vrot.lane.b32.xlu0 %v53, 64
    %v59 = vpop.permute.xlu0 %58
    %60 = vrot.lane.b32.xlu0 %v52, 64
    %v61 = vpop.permute.xlu0 %60
    %67 = vrot.lane.b32.xlu0 %v23, 96
    %v68 = vpop.permute.xlu0 %67
    %vm70 = vcmask 261120
    %v71 = vsel %vm70, %v15, %v36
    %v72 = vsel %vm70, %v16, %v38
    %v73 = vsel %vm70, %v17, %v40
    %v74 = vsel %vm70, %v18, %v42
    %vm75 = vcmask 523264
    %v76 = vsel %vm75, %v71, %v55
    %v77 = vsel %vm75, %v72, %v57
    %v78 = vsel %vm75, %v73, %v59
    %v79 = vsel %vm75, %v74, %v61
    %vm80 = vcmask 785408
    %v81 = vsel %vm80, %v76, %v68
    %v82 = vsel %vm80, %v77, %v68
    %v83 = vsel %vm80, %v78, %v68
    %v84 = vsel %vm80, %v79, %v68
    %v85 = vld [vmem:[%s1] sm:$0xff]
    %v86 = vld [vmem:[%s1 + $0x8] sm:$0xff]
    %v87 = vld [vmem:[%s1 + $0x10] sm:$0xff]
    %v88 = vld [vmem:[%s1 + $0x18] sm:$0xff]
    %v89 = vld [vmem:[%s1 + $0x20] sm:$0xff]
    %v90 = vld [vmem:[%s1 + $0x28] sm:$0xff]
    %v91 = vld [vmem:[%s1 + $0x30] sm:$0xff]
    %v92 = vld [vmem:[%s1 + $0x38] sm:$0xff]
    %v93 = vld [vmem:[%s1 + $0x40] sm:$0xff]
    %v94 = vld [vmem:[%s1 + $0x48] sm:$0xff]
    %v95 = vld [vmem:[%s1 + $0x50] sm:$0xff]
    %v96 = vld [vmem:[%s1 + $0x58] sm:$0xff]
    %v97 = vld [vmem:[%s1 + $0x60] sm:$0xff]
    %v98 = vld [vmem:[%s1 + $0x68] sm:$0xff]
    %v99 = vld [vmem:[%s1 + $0x70] sm:$0xff]
    %v100 = vld [vmem:[%s1 + $0x78] sm:$0xff]
    %v105 = vcombine.high %v81, %v81
    %v107 = vunpack.c.l.s4 1966171168
    %v108 = vunpack.c.0.s8 %v107
    %v109 = vlaneseq
    %v110 = vshrl.u32 %v109, 7
    %v111 = vsub.s32 %v108, %v110
    %v112 = vrot.slane %v81, %v111
    %v114 = vunpack.c.l.s4 1966171168
    %v115 = vunpack.c.0.s8 %v114
    %v116 = vlaneseq
    %v117 = vshrl.u32 %v116, 7
    %v118 = vsub.s32 %v115, %v117
    %v119 = vrot.slane %v105, %v118
    %v120 = vcombine.high %v112, %v112
    %v121 = vcombine.high %v119, %v119
    %v123 = vunpack.c.l.s4 1966171168
    %v124 = vunpack.c.0.s8 %v123
    %v125 = vlaneseq
    %v126 = vshrl.u32 %v125, 7
    %v127 = vsub.s32 %v124, %v126
    %v128 = vrot.slane %v112, %v127
    %v130 = vunpack.c.l.s4 1966171168
    %v131 = vunpack.c.0.s8 %v130
    %v132 = vlaneseq
    %v133 = vshrl.u32 %v132, 7
    %v134 = vsub.s32 %v131, %v133
    %v135 = vrot.slane %v119, %v134
    %v137 = vunpack.c.l.s4 1966171168
    %v138 = vunpack.c.0.s8 %v137
    %v139 = vlaneseq
    %v140 = vshrl.u32 %v139, 7
    %v141 = vsub.s32 %v138, %v140
    %v142 = vrot.slane %v120, %v141
    %v144 = vunpack.c.l.s4 1966171168
    %v145 = vunpack.c.0.s8 %v144
    %v146 = vlaneseq
    %v147 = vshrl.u32 %v146, 7
    %v148 = vsub.s32 %v145, %v147
    %v149 = vrot.slane %v121, %v148
    %v150 = vcombine.high %v128, %v128
    %v151 = vcombine.high %v135, %v135
    %v152 = vcombine.high %v142, %v142
    %v153 = vcombine.high %v149, %v149
    %v155 = vunpack.c.l.s4 1966171168
    %v156 = vunpack.c.0.s8 %v155
    %v157 = vlaneseq
    %v158 = vshrl.u32 %v157, 7
    %v159 = vsub.s32 %v156, %v158
    %v160 = vrot.slane %v82, %v159
    %v161 = vcombine.high %v160, %v160
    %v163 = vunpack.c.l.s4 1966171168
    %v164 = vunpack.c.0.s8 %v163
    %v165 = vlaneseq
    %v166 = vshrl.u32 %v165, 7
    %v167 = vsub.s32 %v164, %v166
    %v168 = vrot.slane %v160, %v167
    %v170 = vunpack.c.l.s4 1966171168
    %v171 = vunpack.c.0.s8 %v170
    %v172 = vlaneseq
    %v173 = vshrl.u32 %v172, 7
    %v174 = vsub.s32 %v171, %v173
    %v175 = vrot.slane %v161, %v174
    %v176 = vcombine.high %v168, %v168
    %v177 = vcombine.high %v83, %v83
    %v179 = vunpack.c.l.s4 1966171168
    %v180 = vunpack.c.0.s8 %v179
    %v181 = vlaneseq
    %v182 = vshrl.u32 %v181, 7
    %v183 = vsub.s32 %v180, %v182
    %v184 = vrot.slane %v83, %v183
    %v186 = vunpack.c.l.s4 1966171168
    %v187 = vunpack.c.0.s8 %v186
    %v188 = vlaneseq
    %v189 = vshrl.u32 %v188, 7
    %v190 = vsub.s32 %v187, %v189
    %v191 = vrot.slane %v177, %v190
    %v192 = vcombine.high %v184, %v184
    %v193 = vcombine.high %v191, %v191
    %v195 = vunpack.c.l.s4 1966171168
    %v196 = vunpack.c.0.s8 %v195
    %v197 = vlaneseq
    %v198 = vshrl.u32 %v197, 7
    %v199 = vsub.s32 %v196, %v198
    %v200 = vrot.slane %v184, %v199
    %v202 = vunpack.c.l.s4 1966171168
    %v203 = vunpack.c.0.s8 %v202
    %v204 = vlaneseq
    %v205 = vshrl.u32 %v204, 7
    %v206 = vsub.s32 %v203, %v205
    %v207 = vrot.slane %v191, %v206
    %v209 = vunpack.c.l.s4 1966171168
    %v210 = vunpack.c.0.s8 %v209
    %v211 = vlaneseq
    %v212 = vshrl.u32 %v211, 7
    %v213 = vsub.s32 %v210, %v212
    %v214 = vrot.slane %v192, %v213
    %v216 = vunpack.c.l.s4 1966171168
    %v217 = vunpack.c.0.s8 %v216
    %v218 = vlaneseq
    %v219 = vshrl.u32 %v218, 7
    %v220 = vsub.s32 %v217, %v219
    %v221 = vrot.slane %v193, %v220
    %v222 = vcombine.high %v200, %v200
    %v223 = vcombine.high %v207, %v207
    %v224 = vcombine.high %v214, %v214
    %v225 = vcombine.high %v221, %v221
    %v227 = vunpack.c.l.s4 1966171168
    %v228 = vunpack.c.0.s8 %v227
    %v229 = vlaneseq
    %v230 = vshrl.u32 %v229, 7
    %v231 = vsub.s32 %v228, %v230
    %v232 = vrot.slane %v84, %v231
    %v233 = vcombine.high %v232, %v232
    %v235 = vunpack.c.l.s4 1966171168
    %v236 = vunpack.c.0.s8 %v235
    %v237 = vlaneseq
    %v238 = vshrl.u32 %v237, 7
    %v239 = vsub.s32 %v236, %v238
    %v240 = vrot.slane %v232, %v239
    %v242 = vunpack.c.l.s4 1966171168
    %v243 = vunpack.c.0.s8 %v242
    %v244 = vlaneseq
    %v245 = vshrl.u32 %v244, 7
    %v246 = vsub.s32 %v243, %v245
    %v247 = vrot.slane %v233, %v246
    %v248 = vcombine.high %v240, %v240
    %v249 = vcombine.low %v128, %v142
    %v250 = vcombine.low %v150, %v152
    %v251 = vcombine.low %v135, %v149
    %v252 = vcombine.low %v151, %v153
    %v254 = vunpack.c.l.s4 1966171168
    %v255 = vunpack.c.0.s8 %v254
    %v256 = vlaneseq
    %v257 = vshrl.u32 %v256, 7
    %v258 = vsub.s32 %v255, %v257
    %v259 = vrot.slane %v249, %v258
    %v261 = vunpack.c.l.s4 1966171168
    %v262 = vunpack.c.0.s8 %v261
    %v263 = vlaneseq
    %v264 = vshrl.u32 %v263, 7
    %v265 = vsub.s32 %v262, %v264
    %v266 = vrot.slane %v250, %v265
    %v268 = vunpack.c.l.s4 1966171168
    %v269 = vunpack.c.0.s8 %v268
    %v270 = vlaneseq
    %v271 = vshrl.u32 %v270, 7
    %v272 = vsub.s32 %v269, %v271
    %v273 = vrot.slane %v251, %v272
    %v275 = vunpack.c.l.s4 1966171168
    %v276 = vunpack.c.0.s8 %v275
    %v277 = vlaneseq
    %v278 = vshrl.u32 %v277, 7
    %v279 = vsub.s32 %v276, %v278
    %v280 = vrot.slane %v252, %v279
    %v281 = vcombine.low %v259, %v266
    %v282 = vcombine.low %v273, %v280
    %v284 = vunpack.c.l.s4 1966171168
    %v285 = vunpack.c.0.s8 %v284
    %v286 = vlaneseq
    %v287 = vshrl.u32 %v286, 7
    %v288 = vsub.s32 %v285, %v287
    %v289 = vrot.slane %v281, %v288
    %v291 = vunpack.c.l.s4 1966171168
    %v292 = vunpack.c.0.s8 %v291
    %v293 = vlaneseq
    %v294 = vshrl.u32 %v293, 7
    %v295 = vsub.s32 %v292, %v294
    %v296 = vrot.slane %v282, %v295
    %v297 = vcombine.low %v289, %v296
    %v298 = vcombine.low %v168, %v175
    %v299 = vcombine.low %v176, %v200
    %v300 = vcombine.low %v214, %v222
    %v301 = vcombine.low %v224, %v207
    %v303 = vunpack.c.l.s4 1966171168
    %v304 = vunpack.c.0.s8 %v303
    %v305 = vlaneseq
    %v306 = vshrl.u32 %v305, 7
    %v307 = vsub.s32 %v304, %v306
    %v308 = vrot.slane %v298, %v307
    %v310 = vunpack.c.l.s4 1966171168
    %v311 = vunpack.c.0.s8 %v310
    %v312 = vlaneseq
    %v313 = vshrl.u32 %v312, 7
    %v314 = vsub.s32 %v311, %v313
    %v315 = vrot.slane %v299, %v314
    %v317 = vunpack.c.l.s4 1966171168
    %v318 = vunpack.c.0.s8 %v317
    %v319 = vlaneseq
    %v320 = vshrl.u32 %v319, 7
    %v321 = vsub.s32 %v318, %v320
    %v322 = vrot.slane %v300, %v321
    %v324 = vunpack.c.l.s4 1966171168
    %v325 = vunpack.c.0.s8 %v324
    %v326 = vlaneseq
    %v327 = vshrl.u32 %v326, 7
    %v328 = vsub.s32 %v325, %v327
    %v329 = vrot.slane %v301, %v328
    %v330 = vcombine.low %v308, %v315
    %v331 = vcombine.low %v322, %v329
    %v333 = vunpack.c.l.s4 1966171168
    %v334 = vunpack.c.0.s8 %v333
    %v335 = vlaneseq
    %v336 = vshrl.u32 %v335, 7
    %v337 = vsub.s32 %v334, %v336
    %v338 = vrot.slane %v330, %v337
    %v340 = vunpack.c.l.s4 1966171168
    %v341 = vunpack.c.0.s8 %v340
    %v342 = vlaneseq
    %v343 = vshrl.u32 %v342, 7
    %v344 = vsub.s32 %v341, %v343
    %v345 = vrot.slane %v331, %v344
    %v346 = vcombine.low %v338, %v345
    %v347 = vcombine.low %v221, %v223
    %v348 = vcombine.low %v225, %v240
    %v349 = vcombine.low %v247, %v248
    %v351 = vunpack.c.l.s4 1966171168
    %v352 = vunpack.c.0.s8 %v351
    %v353 = vlaneseq
    %v354 = vshrl.u32 %v353, 7
    %v355 = vsub.s32 %v352, %v354
    %v356 = vrot.slane %v347, %v355
    %v358 = vunpack.c.l.s4 1966171168
    %v359 = vunpack.c.0.s8 %v358
    %v360 = vlaneseq
    %v361 = vshrl.u32 %v360, 7
    %v362 = vsub.s32 %v359, %v361
    %v363 = vrot.slane %v348, %v362
    %v365 = vunpack.c.l.s4 1966171168
    %v366 = vunpack.c.0.s8 %v365
    %v367 = vlaneseq
    %v368 = vshrl.u32 %v367, 7
    %v369 = vsub.s32 %v366, %v368
    %v370 = vrot.slane %v349, %v369
    %v371 = vcombine.low %v356, %v363
    %v373 = vunpack.c.l.s4 1966171168
    %v374 = vunpack.c.0.s8 %v373
    %v375 = vlaneseq
    %v376 = vshrl.u32 %v375, 7
    %v377 = vsub.s32 %v374, %v376
    %v378 = vrot.slane %v371, %v377
    %v380 = vunpack.c.l.s4 1966171168
    %v381 = vunpack.c.0.s8 %v380
    %v382 = vlaneseq
    %v383 = vshrl.u32 %v382, 7
    %v384 = vsub.s32 %v381, %v383
    %v385 = vrot.slane %v370, %v384
    %v386 = vcombine.low %v378, %v385
    %390 = vmatprep.subr.mxu0 0.0
    %391 = vmatpush1.msra.mxu0 %v85
    %392 = vmatprep.subr.mxu0 0.0
    %393 = vmatpush1.msra.mxu0 %v86
    %394 = vmatprep.subr.mxu0 0.0
    %395 = vmatpush1.msra.mxu0 %v87
    %396 = vmatprep.subr.mxu0 0.0
    %397 = vmatpush1.msra.mxu0 %v88
    %398 = vmatprep.subr.mxu0 0.0
    %399 = vmatpush1.msra.mxu0 %v89
    %400 = vmatprep.subr.mxu0 0.0
    %401 = vmatpush1.msra.mxu0 %v90
    %402 = vmatprep.subr.mxu0 0.0
    %403 = vmatpush1.msra.mxu0 %v91
    %404 = vmatprep.subr.mxu0 0.0
    %405 = vmatpush1.msra.mxu0 %v92
    %406 = vmatprep.subr.mxu0 0.0
    %407 = vmatpush1.msra.mxu0 %v93
    %408 = vmatprep.subr.mxu0 0.0
    %409 = vmatpush1.msra.mxu0 %v94
    %410 = vmatprep.subr.mxu0 0.0
    %411 = vmatpush1.msra.mxu0 %v95
    %412 = vmatprep.subr.mxu0 0.0
    %413 = vmatpush1.msra.mxu0 %v96
    %414 = vmatprep.subr.mxu0 0.0
    %415 = vmatpush1.msra.mxu0 %v97
    %416 = vmatprep.subr.mxu0 0.0
    %417 = vmatpush1.msra.mxu0 %v98
    %418 = vmatprep.subr.mxu0 0.0
    %419 = vmatpush1.msra.mxu0 %v99
    %420 = vmatprep.subr.mxu0 0.0
    %421 = vmatpush1.msra.mxu0 %v100
    %422 = vmatprep.subr.mxu0 0.0
    %423 = vmatpush1.msra.mxu0 0.0
    %424 = vmatprep.subr.mxu0 0.0
    %425 = vmatpush1.msra.mxu0 0.0
    %426 = vmatprep.subr.mxu0 0.0
    %427 = vmatpush1.msra.mxu0 0.0
    %428 = vmatprep.subr.mxu0 0.0
    %429 = vmatpush1.msra.mxu0 0.0
    %430 = vmatprep.subr.mxu0 0.0
    %431 = vmatpush1.msra.mxu0 0.0
    %432 = vmatprep.subr.mxu0 0.0
    %433 = vmatpush1.msra.mxu0 0.0
    %434 = vmatprep.subr.mxu0 0.0
    %435 = vmatpush1.msra.mxu0 0.0
    %436 = vmatprep.subr.mxu0 0.0
    %437 = vmatpush1.msra.mxu0 0.0
    %438 = vmatprep.subr.mxu0 0.0
    %439 = vmatpush1.msra.mxu0 0.0
    %440 = vmatprep.subr.mxu0 0.0
    %441 = vmatpush1.msra.mxu0 0.0
    %442 = vmatprep.subr.mxu0 0.0
    %443 = vmatpush1.msra.mxu0 0.0
    %444 = vmatprep.subr.mxu0 0.0
    %445 = vmatpush1.msra.mxu0 0.0
    %446 = vmatprep.subr.mxu0 0.0
    %447 = vmatpush1.msra.mxu0 0.0
    %448 = vmatprep.subr.mxu0 0.0
    %449 = vmatpush1.msra.mxu0 0.0
    %450 = vmatprep.subr.mxu0 0.0
    %451 = vmatpush1.msra.mxu0 0.0
    %452 = vmatprep.subr.mxu0 0.0
    %453 = vmatpush1.msra.mxu0 0.0
    %454 = vmatprep.mubr.f32.mxu0 0.0
    %455 = vmatmul.mubr.f32.gmra.mrb[0].mxu0 %v297
    %v456 = vpop.f32.mrb[0].mxu0
    %v457 = vadd.f32 0.0, %v456
    %v458 = vpop.f32.mrb[0].mxu0
    %459 = vmatprep.mubr.f32.mxu0 0.0
    %460 = vmatmul.mubr.f32.gmra.mrb[0].mxu0 %v346
    %v461 = vpop.f32.mrb[0].mxu0
    %v462 = vadd.f32 0.0, %v461
    %v463 = vpop.f32.mrb[0].mxu0
    %464 = vmatprep.mubr.f32.mxu0 0.0
    %465 = vmatmul.mubr.f32.gmra.mrb[0].mxu0 %v386
    %v466 = vpop.f32.mrb[0].mxu0
    %v467 = vadd.f32 0.0, %v466
    %v468 = vpop.f32.mrb[0].mxu0
    %469 = vdwg.mxu0
    %v473 = vcombine.high %v457, %v457
    %v475 = vunpack.c.l.s4 1966171168
    %v476 = vunpack.c.0.s8 %v475
    %v477 = vlaneseq
    %v478 = vshrl.u32 %v477, 7
    %v479 = vsub.s32 %v476, %v478
    %v480 = vrot.slane %v457, %v479
    %v482 = vunpack.c.l.s4 1966171168
    %v483 = vunpack.c.0.s8 %v482
    %v484 = vlaneseq
    %v485 = vshrl.u32 %v484, 7
    %v486 = vsub.s32 %v483, %v485
    %v487 = vrot.slane %v473, %v486
    %v488 = vcombine.high %v480, %v480
    %v489 = vcombine.high %v487, %v487
    %v491 = vunpack.c.l.s4 1966171168
    %v492 = vunpack.c.0.s8 %v491
    %v493 = vlaneseq
    %v494 = vshrl.u32 %v493, 7
    %v495 = vsub.s32 %v492, %v494
    %v496 = vrot.slane %v480, %v495
    %v498 = vunpack.c.l.s4 1966171168
    %v499 = vunpack.c.0.s8 %v498
    %v500 = vlaneseq
    %v501 = vshrl.u32 %v500, 7
    %v502 = vsub.s32 %v499, %v501
    %v503 = vrot.slane %v487, %v502
    %v505 = vunpack.c.l.s4 1966171168
    %v506 = vunpack.c.0.s8 %v505
    %v507 = vlaneseq
    %v508 = vshrl.u32 %v507, 7
    %v509 = vsub.s32 %v506, %v508
    %v510 = vrot.slane %v488, %v509
    %v512 = vunpack.c.l.s4 1966171168
    %v513 = vunpack.c.0.s8 %v512
    %v514 = vlaneseq
    %v515 = vshrl.u32 %v514, 7
    %v516 = vsub.s32 %v513, %v515
    %v517 = vrot.slane %v489, %v516
    %v518 = vcombine.high %v496, %v496
    %v519 = vcombine.high %v503, %v503
    %v520 = vcombine.high %v510, %v510
    %v521 = vcombine.high %v517, %v517
    %v522 = vcombine.high %v462, %v462
    %v524 = vunpack.c.l.s4 1966171168
    %v525 = vunpack.c.0.s8 %v524
    %v526 = vlaneseq
    %v527 = vshrl.u32 %v526, 7
    %v528 = vsub.s32 %v525, %v527
    %v529 = vrot.slane %v462, %v528
    %v531 = vunpack.c.l.s4 1966171168
    %v532 = vunpack.c.0.s8 %v531
    %v533 = vlaneseq
    %v534 = vshrl.u32 %v533, 7
    %v535 = vsub.s32 %v532, %v534
    %v536 = vrot.slane %v522, %v535
    %v537 = vcombine.high %v529, %v529
    %v538 = vcombine.high %v536, %v536
    %v540 = vunpack.c.l.s4 1966171168
    %v541 = vunpack.c.0.s8 %v540
    %v542 = vlaneseq
    %v543 = vshrl.u32 %v542, 7
    %v544 = vsub.s32 %v541, %v543
    %v545 = vrot.slane %v529, %v544
    %v547 = vunpack.c.l.s4 1966171168
    %v548 = vunpack.c.0.s8 %v547
    %v549 = vlaneseq
    %v550 = vshrl.u32 %v549, 7
    %v551 = vsub.s32 %v548, %v550
    %v552 = vrot.slane %v536, %v551
    %v554 = vunpack.c.l.s4 1966171168
    %v555 = vunpack.c.0.s8 %v554
    %v556 = vlaneseq
    %v557 = vshrl.u32 %v556, 7
    %v558 = vsub.s32 %v555, %v557
    %v559 = vrot.slane %v537, %v558
    %v561 = vunpack.c.l.s4 1966171168
    %v562 = vunpack.c.0.s8 %v561
    %v563 = vlaneseq
    %v564 = vshrl.u32 %v563, 7
    %v565 = vsub.s32 %v562, %v564
    %v566 = vrot.slane %v538, %v565
    %v567 = vcombine.high %v545, %v545
    %v568 = vcombine.high %v552, %v552
    %v569 = vcombine.high %v559, %v559
    %v570 = vcombine.high %v566, %v566
    %v571 = vcombine.high %v467, %v467
    %v573 = vunpack.c.l.s4 1966171168
    %v574 = vunpack.c.0.s8 %v573
    %v575 = vlaneseq
    %v576 = vshrl.u32 %v575, 7
    %v577 = vsub.s32 %v574, %v576
    %v578 = vrot.slane %v467, %v577
    %v580 = vunpack.c.l.s4 1966171168
    %v581 = vunpack.c.0.s8 %v580
    %v582 = vlaneseq
    %v583 = vshrl.u32 %v582, 7
    %v584 = vsub.s32 %v581, %v583
    %v585 = vrot.slane %v571, %v584
    %v586 = vcombine.high %v578, %v578
    %v587 = vcombine.high %v585, %v585
    %v589 = vunpack.c.l.s4 1966171168
    %v590 = vunpack.c.0.s8 %v589
    %v591 = vlaneseq
    %v592 = vshrl.u32 %v591, 7
    %v593 = vsub.s32 %v590, %v592
    %v594 = vrot.slane %v578, %v593
    %v596 = vunpack.c.l.s4 1966171168
    %v597 = vunpack.c.0.s8 %v596
    %v598 = vlaneseq
    %v599 = vshrl.u32 %v598, 7
    %v600 = vsub.s32 %v597, %v599
    %v601 = vrot.slane %v585, %v600
    %v603 = vunpack.c.l.s4 1966171168
    %v604 = vunpack.c.0.s8 %v603
    %v605 = vlaneseq
    %v606 = vshrl.u32 %v605, 7
    %v607 = vsub.s32 %v604, %v606
    %v608 = vrot.slane %v586, %v607
    %v610 = vunpack.c.l.s4 1966171168
    %v611 = vunpack.c.0.s8 %v610
    %v612 = vlaneseq
    %v613 = vshrl.u32 %v612, 7
    %v614 = vsub.s32 %v611, %v613
    %v615 = vrot.slane %v587, %v614
    %v616 = vcombine.high %v594, %v594
    %v617 = vcombine.high %v608, %v608
    %v640 = vmax.f32 %v496, 0.0
    %v641 = vmax.f32 %v510, 0.0
    %v642 = vmax.f32 %v518, 0.0
    %v643 = vmax.f32 %v520, 0.0
    %v644 = vmax.f32 %v503, 0.0
    %v645 = vmax.f32 %v517, 0.0
    %v646 = vmax.f32 %v519, 0.0
    %v647 = vmax.f32 %v521, 0.0
    %v648 = vmax.f32 %v545, 0.0
    %v649 = vmax.f32 %v559, 0.0
    %v650 = vmax.f32 %v567, 0.0
    %v651 = vmax.f32 %v569, 0.0
    %v652 = vmax.f32 %v552, 0.0
    %v653 = vmax.f32 %v566, 0.0
    %v654 = vmax.f32 %v568, 0.0
    %v655 = vmax.f32 %v570, 0.0
    %v656 = vmax.f32 %v594, 0.0
    %v657 = vmax.f32 %v608, 0.0
    %v658 = vmax.f32 %v616, 0.0
    %v659 = vmax.f32 %v617, 0.0
    %v660 = vmax.f32 %v601, 0.0
    %v661 = vmax.f32 %v615, 0.0
    %v662 = vlaneseq
    %v663 = vshrl.u32 %v662, 7
    %v664 = vadd.s32 %v663, 8
    %vm665 = vcmp.ge.s32.totalorder %v20, 8
    %vm666 = vcmp.lt.s32.totalorder %v20, 16
    %vm667 = vmand %vm665, %vm666
    %v668 = vsel %vm667, 10, 11
    %vm669 = vcmp.lt.s32.totalorder %v663, %v668
    %vm670 = vcmp.lt.s32.totalorder %v664, %v668
    %v693 = vcombine.low %v640, %v641
    %v694 = vcombine.low %v642, %v643
    %v695 = vcombine.low %v644, %v645
    %v696 = vcombine.low %v646, %v647
    %v698 = vunpack.c.l.s4 1966171168
    %v699 = vunpack.c.0.s8 %v698
    %v700 = vlaneseq
    %v701 = vshrl.u32 %v700, 7
    %v702 = vsub.s32 %v699, %v701
    %v703 = vrot.slane %v693, %v702
    %v705 = vunpack.c.l.s4 1966171168
    %v706 = vunpack.c.0.s8 %v705
    %v707 = vlaneseq
    %v708 = vshrl.u32 %v707, 7
    %v709 = vsub.s32 %v706, %v708
    %v710 = vrot.slane %v694, %v709
    %v712 = vunpack.c.l.s4 1966171168
    %v713 = vunpack.c.0.s8 %v712
    %v714 = vlaneseq
    %v715 = vshrl.u32 %v714, 7
    %v716 = vsub.s32 %v713, %v715
    %v717 = vrot.slane %v695, %v716
    %v719 = vunpack.c.l.s4 1966171168
    %v720 = vunpack.c.0.s8 %v719
    %v721 = vlaneseq
    %v722 = vshrl.u32 %v721, 7
    %v723 = vsub.s32 %v720, %v722
    %v724 = vrot.slane %v696, %v723
    %v725 = vcombine.low %v703, %v710
    %v726 = vcombine.low %v717, %v724
    %v728 = vunpack.c.l.s4 1966171168
    %v729 = vunpack.c.0.s8 %v728
    %v730 = vlaneseq
    %v731 = vshrl.u32 %v730, 7
    %v732 = vsub.s32 %v729, %v731
    %v733 = vrot.slane %v725, %v732
    %v735 = vunpack.c.l.s4 1966171168
    %v736 = vunpack.c.0.s8 %v735
    %v737 = vlaneseq
    %v738 = vshrl.u32 %v737, 7
    %v739 = vsub.s32 %v736, %v738
    %v740 = vrot.slane %v726, %v739
    %v741 = vcombine.low %v733, %v740
    %v742 = vcombine.low %v648, %v649
    %v744 = vunpack.c.l.s4 1966171168
    %v745 = vunpack.c.0.s8 %v744
    %v746 = vlaneseq
    %v747 = vshrl.u32 %v746, 7
    %v748 = vsub.s32 %v745, %v747
    %v749 = vrot.slane %v742, %v748
    %v751 = vunpack.c.l.s4 1966171168
    %v752 = vunpack.c.0.s8 %v751
    %v753 = vlaneseq
    %v754 = vshrl.u32 %v753, 7
    %v755 = vsub.s32 %v752, %v754
    %v756 = vrot.slane %v650, %v755
    %v757 = vcombine.low %v749, %v756
    %v759 = vunpack.c.l.s4 1966171168
    %v760 = vunpack.c.0.s8 %v759
    %v761 = vlaneseq
    %v762 = vshrl.u32 %v761, 7
    %v763 = vsub.s32 %v760, %v762
    %v764 = vrot.slane %v757, %v763
    %v765 = vcombine.low %v651, %v652
    %v766 = vcombine.low %v653, %v654
    %v767 = vcombine.low %v655, %v656
    %v768 = vcombine.low %v657, %v658
    %v770 = vunpack.c.l.s4 1966171168
    %v771 = vunpack.c.0.s8 %v770
    %v772 = vlaneseq
    %v773 = vshrl.u32 %v772, 7
    %v774 = vsub.s32 %v771, %v773
    %v775 = vrot.slane %v765, %v774
    %v777 = vunpack.c.l.s4 1966171168
    %v778 = vunpack.c.0.s8 %v777
    %v779 = vlaneseq
    %v780 = vshrl.u32 %v779, 7
    %v781 = vsub.s32 %v778, %v780
    %v782 = vrot.slane %v766, %v781
    %v784 = vunpack.c.l.s4 1966171168
    %v785 = vunpack.c.0.s8 %v784
    %v786 = vlaneseq
    %v787 = vshrl.u32 %v786, 7
    %v788 = vsub.s32 %v785, %v787
    %v789 = vrot.slane %v767, %v788
    %v791 = vunpack.c.l.s4 1966171168
    %v792 = vunpack.c.0.s8 %v791
    %v793 = vlaneseq
    %v794 = vshrl.u32 %v793, 7
    %v795 = vsub.s32 %v792, %v794
    %v796 = vrot.slane %v768, %v795
    %v797 = vcombine.low %v775, %v782
    %v798 = vcombine.low %v789, %v796
    %v800 = vunpack.c.l.s4 1966171168
    %v801 = vunpack.c.0.s8 %v800
    %v802 = vlaneseq
    %v803 = vshrl.u32 %v802, 7
    %v804 = vsub.s32 %v801, %v803
    %v805 = vrot.slane %v797, %v804
    %v807 = vunpack.c.l.s4 1966171168
    %v808 = vunpack.c.0.s8 %v807
    %v809 = vlaneseq
    %v810 = vshrl.u32 %v809, 7
    %v811 = vsub.s32 %v808, %v810
    %v812 = vrot.slane %v798, %v811
    %v813 = vcombine.low %v805, %v812
    %v814 = vcombine.low %v659, %v660
    %v816 = vunpack.c.l.s4 1966171168
    %v817 = vunpack.c.0.s8 %v816
    %v818 = vlaneseq
    %v819 = vshrl.u32 %v818, 7
    %v820 = vsub.s32 %v817, %v819
    %v821 = vrot.slane %v814, %v820
    %v823 = vunpack.c.l.s4 1966171168
    %v824 = vunpack.c.0.s8 %v823
    %v825 = vlaneseq
    %v826 = vshrl.u32 %v825, 7
    %v827 = vsub.s32 %v824, %v826
    %v828 = vrot.slane %v661, %v827
    %v829 = vcombine.low %v821, %v828
    %v831 = vunpack.c.l.s4 1966171168
    %v832 = vunpack.c.0.s8 %v831
    %v833 = vlaneseq
    %v834 = vshrl.u32 %v833, 7
    %v835 = vsub.s32 %v832, %v834
    %v836 = vrot.slane %v829, %v835
    %v841 = vsel %vm669, %v741, 0.0
    %v842 = vsel %vm670, %v764, 0.0
    %v843 = vsel %vm669, %v813, 0.0
    %v844 = vsel %vm670, %v836, 0.0
    %vm845 = vcmask 138240
    %v846 = vsel %vm845, %v841, 0.0
    %vm847 = vcmask 133120
    %v848 = vsel %vm847, %v842, 0.0
    %v849 = vadd.f32 %v846, %v848
    %v850 = vrot.slane %v849, 4
    %v851 = vadd.f32 %v849, %v850
    %v852 = vrot.slane %v851, 2
    %v853 = vadd.f32 %v851, %v852
    %v854 = vrot.slane %v853, 1
    %v855 = vadd.f32 %v853, %v854
    %v856 = vsel %vm845, %v843, 0.0
    %v857 = vsel %vm847, %v844, 0.0
    %v858 = vadd.f32 %v856, %v857
    %v859 = vrot.slane %v858, 4
    %v860 = vadd.f32 %v858, %v859
    %v861 = vrot.slane %v860, 2
    %v862 = vadd.f32 %v860, %v861
    %v863 = vrot.slane %v862, 1
    %v864 = vadd.f32 %v862, %v863
    %v865 = vld [vmem:[%s2] sm:$0xff]
    %v866 = vld [vmem:[%s2 + $0x8] sm:$0xff]
    %v867 = vld [vmem:[%s2 + $0x10] sm:$0x1]
    %vm870 = vcmask 1041409
    %v871 = vsel %vm870, %v864, %v855
    %v872 = vsel %vm845, %v871, 0
    %vm874 = vcmask 1040384
    %v876 = vsel %vm874, %v867, 0
    %878 = vmatprep.subr.mxu0 0.0
    %879 = vmatpush1.msra.mxu0 %v865
    %880 = vmatprep.subr.mxu0 0.0
    %881 = vmatpush1.msra.mxu0 %v866
    %882 = vmatprep.subr.mxu0 0.0
    %883 = vmatpush1.msra.mxu0 %v876
    %884 = vmatprep.subr.mxu0 0.0
    %885 = vmatpush1.msra.mxu0 0.0
    %886 = vmatprep.subr.mxu0 0.0
    %887 = vmatpush1.msra.mxu0 0.0
    %888 = vmatprep.subr.mxu0 0.0
    %889 = vmatpush1.msra.mxu0 0.0
    %890 = vmatprep.subr.mxu0 0.0
    %891 = vmatpush1.msra.mxu0 0.0
    %892 = vmatprep.subr.mxu0 0.0
    %893 = vmatpush1.msra.mxu0 0.0
    %894 = vmatprep.subr.mxu0 0.0
    %895 = vmatpush1.msra.mxu0 0.0
    %896 = vmatprep.subr.mxu0 0.0
    %897 = vmatpush1.msra.mxu0 0.0
    %898 = vmatprep.subr.mxu0 0.0
    %899 = vmatpush1.msra.mxu0 0.0
    %900 = vmatprep.subr.mxu0 0.0
    %901 = vmatpush1.msra.mxu0 0.0
    %902 = vmatprep.subr.mxu0 0.0
    %903 = vmatpush1.msra.mxu0 0.0
    %904 = vmatprep.subr.mxu0 0.0
    %905 = vmatpush1.msra.mxu0 0.0
    %906 = vmatprep.subr.mxu0 0.0
    %907 = vmatpush1.msra.mxu0 0.0
    %908 = vmatprep.subr.mxu0 0.0
    %909 = vmatpush1.msra.mxu0 0.0
    %910 = vmatprep.subr.mxu0 0.0
    %911 = vmatpush1.msra.mxu0 0.0
    %912 = vmatprep.subr.mxu0 0.0
    %913 = vmatpush1.msra.mxu0 0.0
    %914 = vmatprep.subr.mxu0 0.0
    %915 = vmatpush1.msra.mxu0 0.0
    %916 = vmatprep.subr.mxu0 0.0
    %917 = vmatpush1.msra.mxu0 0.0
    %918 = vmatprep.subr.mxu0 0.0
    %919 = vmatpush1.msra.mxu0 0.0
    %920 = vmatprep.subr.mxu0 0.0
    %921 = vmatpush1.msra.mxu0 0.0
    %922 = vmatprep.subr.mxu0 0.0
    %923 = vmatpush1.msra.mxu0 0.0
    %924 = vmatprep.subr.mxu0 0.0
    %925 = vmatpush1.msra.mxu0 0.0
    %926 = vmatprep.subr.mxu0 0.0
    %927 = vmatpush1.msra.mxu0 0.0
    %928 = vmatprep.subr.mxu0 0.0
    %929 = vmatpush1.msra.mxu0 0.0
    %930 = vmatprep.subr.mxu0 0.0
    %931 = vmatpush1.msra.mxu0 0.0
    %932 = vmatprep.subr.mxu0 0.0
    %933 = vmatpush1.msra.mxu0 0.0
    %934 = vmatprep.subr.mxu0 0.0
    %935 = vmatpush1.msra.mxu0 0.0
    %936 = vmatprep.subr.mxu0 0.0
    %937 = vmatpush1.msra.mxu0 0.0
    %938 = vmatprep.subr.mxu0 0.0
    %939 = vmatpush1.msra.mxu0 0.0
    %940 = vmatprep.subr.mxu0 0.0
    %941 = vmatpush1.msra.mxu0 0.0
    %942 = vmatprep.mubr.f32.mxu0 0.0
    %943 = vmatmul.mubr.f32.gmra.mrb[0].mxu0 %v872
    %v944 = vpop.f32.mrb[0].mxu0
    %v945 = vadd.f32 0.0, %v944
    %v946 = vpop.f32.mrb[0].mxu0
    %947 = vdwg.mxu0
    %948 = vst [vmem:[#allocation2] sm:$0x3] %v945
    // Predicated region
    $region14: #{tpu_custom_call.1} parent=1 // pred_check
      _
    $region15: #{tpu_custom_call.1} parent=1 // pred_check_branch
      %950 = sbr.rel (0) target = $region17
    $region16: #{tpu_custom_call.1} parent=1 // pred_region
      %s952 = ssub.s32 32, 32
      %953 = vsyncadd [#allocation3], %s952
      %s955 = sshll.u32 [#allocation2], 4
      %s956 = int_to_ptr.vmem [resolvable:$true] %s955
      %958 = dma.vmem_to_hbm [thread:$0]  %s956, 32, %s3, [#allocation3]
    $region17: #{tpu_custom_call.1} parent=1 // pred_fallthru
      _
    // Predicated region
    $region18: #{tpu_custom_call.1} parent=1 // pred_check
      _
    $region19: #{tpu_custom_call.1} parent=1 // pred_check_branch
      %960 = sbr.rel (0) target = $region21
    $region20: #{tpu_custom_call.1} parent=1 // pred_region
      %961 = dma.done [#allocation3], 32
    $region21: #{tpu_custom_call.1} parent=1 // pred_fallthru
      _
    %962 = vsyncpa [#allocation3], 1

</llo_original>
